<compile_context>
chip_gen: v7x
topology: tpu7x:2x2x1
jax: 0.10.0
libtpu: 0.0.40
codegen_flags: <defaults>
</compile_context>

<pallas_src>
import jax
import jax.numpy as jnp
from jax.experimental import pallas as pl
from jax.experimental.pallas import tpu as pltpu

LANE = 128  # TPU lane width; hidden dims padded up to a multiple of this.


def _round_up(n, m):
    return ((n + m - 1) // m) * m


def _mlp_kernel(x_ref, w1_ref, b1_ref, w2_ref, b2_ref, w3_ref, b3_ref,
                w4_ref, b4_ref, o_ref):
    """Fused 4-layer MLP on one (tile_b, input_size) batch tile."""
    # x arrives f32 (single HBM read, no wrapper astype); cast on the VPU.
    xb = x_ref[...].astype(jnp.bfloat16)

    # Layer 1: bf16 MXU matmul, f32 accumulate; bias + ReLU on the VPU.
    h = jnp.dot(xb, w1_ref[...], preferred_element_type=jnp.float32)
    h = jnp.maximum(h + b1_ref[...], 0.0)
    # Dropout(0.2) == identity in eval mode.

    # Layer 2 (output cols 64..127 are zero-padded -> stay exactly 0 post-ReLU).
    h = jnp.dot(h.astype(jnp.bfloat16), w2_ref[...],
                preferred_element_type=jnp.float32)
    h = jnp.maximum(h + b2_ref[...], 0.0)

    # Layer 3 (output cols 32..127 zero-padded).
    h = jnp.dot(h.astype(jnp.bfloat16), w3_ref[...],
                preferred_element_type=jnp.float32)
    h = jnp.maximum(h + b3_ref[...], 0.0)

    # Layer 4: 1-unit head, contracted so the batch lands on LANES:
    #   out[o, b] = sum_h w4[o, h] * h3[b, h]        (o == 1)
    # -> lane-dense (1, tile_b) store instead of a masked (tile_b, 1) one.
    out = jnp.einsum("oh,bh->ob", w4_ref[...], h.astype(jnp.bfloat16),
                     preferred_element_type=jnp.float32)
    o_ref[...] = (out + b4_ref[...]).astype(o_ref.dtype)


def init_params(key, input_size, hidden_size=128):
    """Logical (unpadded, f32) params mimicking PyTorch's U(-1/sqrt(fan_in), ·).

    Weights stored as (fan_in, fan_out) so each layer is x @ W + b.
    """
    dims = [input_size, hidden_size, hidden_size // 2, hidden_size // 4, 1]
    params = {}
    keys = jax.random.split(key, 2 * (len(dims) - 1))
    for i in range(len(dims) - 1):
        fan_in, fan_out = dims[i], dims[i + 1]
        bound = 1.0 / (fan_in ** 0.5)
        params[f"w{i+1}"] = jax.random.uniform(
            keys[2 * i], (fan_in, fan_out), jnp.float32, -bound, bound)
        params[f"b{i+1}"] = jax.random.uniform(
            keys[2 * i + 1], (1, fan_out), jnp.float32, -bound, bound)
    return params


def prepare_params(params):
    """Pad hidden widths to full 128-lane tiles, cast weight matrices to bf16.

    Padded bias columns are kept exactly 0 (f32) so padded activation lanes stay
    0 through ReLU and contribute nothing to the next matmul — keep invariant.
    """
    def pad2(a, rows, cols):
        return jnp.pad(a, ((0, rows - a.shape[0]), (0, cols - a.shape[1])))

    h1 = params["w1"].shape[1]                     # hidden_size
    h2 = params["w2"].shape[1]                     # hidden_size // 2
    h3 = params["w3"].shape[1]                     # hidden_size // 4
    h1p = _round_up(h1, LANE)
    h2p = _round_up(h2, LANE)
    h3p = _round_up(h3, LANE)

    w1 = pad2(params["w1"], params["w1"].shape[0], h1p).astype(jnp.bfloat16)
    b1 = pad2(params["b1"], 1, h1p)                              # f32
    w2 = pad2(params["w2"], h1p, h2p).astype(jnp.bfloat16)
    b2 = pad2(params["b2"], 1, h2p)                              # f32
    w3 = pad2(params["w3"], h2p, h3p).astype(jnp.bfloat16)
    b3 = pad2(params["b3"], 1, h3p)                              # f32
    w4 = pad2(params["w4"].T, 1, h3p).astype(jnp.bfloat16)       # (1, h3p)
    b4 = params["b4"]                                            # (1, 1) f32
    return (w1, b1, w2, b2, w3, b3, w4, b4)


def dynamic_pricing_forward(x, kernel_params, *, tile_b=512):
    """x: (B, input_size) f32 (or bf16). kernel_params: prepare_params() output.

    Returns (B, 1) f32 predictions (eval-mode semantics, Dropout == identity).
    """
    B, in_size = x.shape
    w1, b1, w2, b2, w3, b3, w4, b4 = kernel_params
    weight_args = (w1, b1, w2, b2, w3, b3, w4, b4)

    # Tile selection:
    #  - big tiles amortize the ~0.35us per-grid-step overhead,
    #  - never bigger than the (sublane-aligned) batch,
    #  - large batches keep >= 2 grid steps so the "parallel" batch axis can
    #    split across v7x's two TensorCores.
    if B >= 256:
        tile = min(tile_b, _round_up(pl.cdiv(B, 2), 8))
    else:
        tile = min(tile_b, _round_up(B, 8))
    grid_b = pl.cdiv(B, tile)
    b_pad = grid_b * tile

    if b_pad != B:
        # Tail-only zero rows (< tile); keeps every input block in-bounds.
        x = jnp.concatenate(
            [x, jnp.zeros((b_pad - B, in_size), x.dtype)], axis=0)

    def resident(a):
        # Constant block index -> DMA'd once, stays VMEM-resident across steps.
        return pl.BlockSpec(a.shape, lambda i, _nd=a.ndim: (0,) * _nd)

    flops = 2 * b_pad * (in_size * w1.shape[1]
                         + w2.shape[0] * w2.shape[1]
                         + w3.shape[0] * w3.shape[1]
                         + w4.shape[1])
    bytes_accessed = (x.size * x.dtype.itemsize
                      + sum(a.size * a.dtype.itemsize for a in weight_args)
                      + b_pad * 4)

    out = pl.pallas_call(
        _mlp_kernel,
        out_shape=jax.ShapeDtypeStruct((grid_b, tile), jnp.float32),
        grid=(grid_b,),
        in_specs=[pl.BlockSpec((tile, in_size), lambda i: (i, 0))]
                 + [resident(a) for a in weight_args],
        out_specs=pl.BlockSpec((1, tile), lambda i: (i, 0)),
        compiler_params=pltpu.CompilerParams(
            dimension_semantics=("parallel",),
            vmem_limit_bytes=32 * 1024 * 1024),
        cost_estimate=pl.CostEstimate(flops=flops, transcendentals=0,
                                      bytes_accessed=bytes_accessed),
    )(x, *weight_args)

    # (grid_b, tile) -> flat (contiguous, free) -> slice -> (B, 1).
    return out.reshape(-1)[:B, None]


def _reference_forward(x, params):
    h = jnp.maximum(x @ params["w1"] + params["b1"], 0.0)
    h = jnp.maximum(h @ params["w2"] + params["b2"], 0.0)
    h = jnp.maximum(h @ params["w3"] + params["b3"], 0.0)
    return h @ params["w4"] + params["b4"]


if __name__ == "__main__":
    INPUT_SIZE = 32
    HIDDEN = 128

    key = jax.random.PRNGKey(0)
    k_params, k_x1, k_x2 = jax.random.split(key, 3)
    params = init_params(k_params, INPUT_SIZE, HIDDEN)
    kernel_params = prepare_params(params)

    # Small batch: single right-sized tile, no padding, no wrapper passes.
    x_small = jax.random.normal(k_x1, (8, INPUT_SIZE), dtype=jnp.float32)
    out_small = jax.block_until_ready(
        dynamic_pricing_forward(x_small, kernel_params))
    ref_small = _reference_forward(x_small, params)
    assert out_small.shape == (8, 1), out_small.shape
    # bf16 weights/activations with f32 accumulation -> relaxed tolerance.
    assert jnp.allclose(out_small, ref_small, atol=5e-2, rtol=5e-2), \
        float(jnp.max(jnp.abs(out_small - ref_small)))

    # Larger batch: exercises the multi-tile grid (>=2 steps) + ragged tail.
    x_big = jax.random.normal(k_x2, (300, INPUT_SIZE), dtype=jnp.float32)
    out_big = jax.block_until_ready(
        dynamic_pricing_forward(x_big, kernel_params))
    ref_big = _reference_forward(x_big, params)
    assert out_big.shape == (300, 1), out_big.shape
    assert jnp.allclose(out_big, ref_big, atol=5e-2, rtol=5e-2), \
        float(jnp.max(jnp.abs(out_big - ref_big)))

    # TODO(synk): training-mode Dropout(0.2) is not implemented (eval/inference
    # semantics only), matching nn.Module.eval() behaviour.
    print("KERNEL_OK")
</pallas_src>

<mosaic_0001>
module attributes {stable_mosaic.version = 11 : i64} {
  func.func @_mlp_kernel(%arg0: i32, %arg1: memref<8x32xf32, #tpu.memory_space<vmem>>, %arg2: memref<32x128xbf16, #tpu.memory_space<vmem>>, %arg3: memref<1x128xf32, #tpu.memory_space<vmem>>, %arg4: memref<128x128xbf16, #tpu.memory_space<vmem>>, %arg5: memref<1x128xf32, #tpu.memory_space<vmem>>, %arg6: memref<128x128xbf16, #tpu.memory_space<vmem>>, %arg7: memref<1x128xf32, #tpu.memory_space<vmem>>, %arg8: memref<1x128xbf16, #tpu.memory_space<vmem>>, %arg9: memref<1x1xf32, #tpu.memory_space<vmem>>, %arg10: memref<1x8xf32, #tpu.memory_space<vmem>>) attributes {dimension_semantics = [#tpu.dimension_semantics<parallel>], iteration_bounds = array<i64: 1>, scalar_prefetch = 0 : i64, scratch_operands = 0 : i64, tpu.core_type = #tpu.core_type<tc>, window_params = [{transform_indices = @transform_0, window_bounds = array<i64: 8, 32>}, {pipeline_mode = #tpu.pipeline_mode<synchronous>, transform_indices = @transform_1, window_bounds = array<i64: 32, 128>}, {pipeline_mode = #tpu.pipeline_mode<synchronous>, transform_indices = @transform_2, window_bounds = array<i64: 1, 128>}, {pipeline_mode = #tpu.pipeline_mode<synchronous>, transform_indices = @transform_3, window_bounds = array<i64: 128, 128>}, {pipeline_mode = #tpu.pipeline_mode<synchronous>, transform_indices = @transform_4, window_bounds = array<i64: 1, 128>}, {pipeline_mode = #tpu.pipeline_mode<synchronous>, transform_indices = @transform_5, window_bounds = array<i64: 128, 128>}, {pipeline_mode = #tpu.pipeline_mode<synchronous>, transform_indices = @transform_6, window_bounds = array<i64: 1, 128>}, {pipeline_mode = #tpu.pipeline_mode<synchronous>, transform_indices = @transform_7, window_bounds = array<i64: 1, 128>}, {pipeline_mode = #tpu.pipeline_mode<synchronous>, transform_indices = @transform_8, window_bounds = array<i64: 1, 1>}, {transform_indices = @transform_9, window_bounds = array<i64: 1, 8>}]} {
    %c0 = arith.constant 0 : index
    %c0_0 = arith.constant 0 : index
    %0 = vector.load %arg1[%c0, %c0_0] : memref<8x32xf32, #tpu.memory_space<vmem>>, vector<8x32xf32>
    %1 = arith.truncf %0 : vector<8x32xf32> to vector<8x32xbf16>
    %c0_1 = arith.constant 0 : index
    %c0_2 = arith.constant 0 : index
    %2 = vector.load %arg2[%c0_1, %c0_2] : memref<32x128xbf16, #tpu.memory_space<vmem>>, vector<32x128xbf16>
    %cst = arith.constant dense<0.000000e+00> : vector<8x128xf32>
    %3 = tpu.matmul %1, %2, %cst {dimension_numbers = #tpu.dot_dimension_numbers<[1], [0], [0], [1], [0, 0, 1, 1], [], []>} : vector<8x32xbf16>, vector<32x128xbf16>, vector<8x128xf32> -> vector<8x128xf32>
    %c0_3 = arith.constant 0 : index
    %c0_4 = arith.constant 0 : index
    %4 = vector.load %arg3[%c0_3, %c0_4] : memref<1x128xf32, #tpu.memory_space<vmem>>, vector<1x128xf32>
    %5 = vector.broadcast %4 : vector<1x128xf32> to vector<8x128xf32>
    %6 = arith.addf %3, %5 : vector<8x128xf32>
    %cst_5 = arith.constant 0.000000e+00 : f32
    %7 = vector.broadcast %cst_5 : f32 to vector<8x128xf32>
    %8 = arith.maximumf %6, %7 : vector<8x128xf32>
    %9 = arith.truncf %8 : vector<8x128xf32> to vector<8x128xbf16>
    %c0_6 = arith.constant 0 : index
    %c0_7 = arith.constant 0 : index
    %10 = vector.load %arg4[%c0_6, %c0_7] : memref<128x128xbf16, #tpu.memory_space<vmem>>, vector<128x128xbf16>
    %cst_8 = arith.constant dense<0.000000e+00> : vector<8x128xf32>
    %11 = tpu.matmul %9, %10, %cst_8 {dimension_numbers = #tpu.dot_dimension_numbers<[1], [0], [0], [1], [0, 0, 1, 1], [], []>} : vector<8x128xbf16>, vector<128x128xbf16>, vector<8x128xf32> -> vector<8x128xf32>
    %c0_9 = arith.constant 0 : index
    %c0_10 = arith.constant 0 : index
    %12 = vector.load %arg5[%c0_9, %c0_10] : memref<1x128xf32, #tpu.memory_space<vmem>>, vector<1x128xf32>
    %13 = vector.broadcast %12 : vector<1x128xf32> to vector<8x128xf32>
    %14 = arith.addf %11, %13 : vector<8x128xf32>
    %cst_11 = arith.constant 0.000000e+00 : f32
    %15 = vector.broadcast %cst_11 : f32 to vector<8x128xf32>
    %16 = arith.maximumf %14, %15 : vector<8x128xf32>
    %17 = arith.truncf %16 : vector<8x128xf32> to vector<8x128xbf16>
    %c0_12 = arith.constant 0 : index
    %c0_13 = arith.constant 0 : index
    %18 = vector.load %arg6[%c0_12, %c0_13] : memref<128x128xbf16, #tpu.memory_space<vmem>>, vector<128x128xbf16>
    %cst_14 = arith.constant dense<0.000000e+00> : vector<8x128xf32>
    %19 = tpu.matmul %17, %18, %cst_14 {dimension_numbers = #tpu.dot_dimension_numbers<[1], [0], [0], [1], [0, 0, 1, 1], [], []>} : vector<8x128xbf16>, vector<128x128xbf16>, vector<8x128xf32> -> vector<8x128xf32>
    %c0_15 = arith.constant 0 : index
    %c0_16 = arith.constant 0 : index
    %20 = vector.load %arg7[%c0_15, %c0_16] : memref<1x128xf32, #tpu.memory_space<vmem>>, vector<1x128xf32>
    %21 = vector.broadcast %20 : vector<1x128xf32> to vector<8x128xf32>
    %22 = arith.addf %19, %21 : vector<8x128xf32>
    %cst_17 = arith.constant 0.000000e+00 : f32
    %23 = vector.broadcast %cst_17 : f32 to vector<8x128xf32>
    %24 = arith.maximumf %22, %23 : vector<8x128xf32>
    %c0_18 = arith.constant 0 : index
    %c0_19 = arith.constant 0 : index
    %25 = vector.load %arg8[%c0_18, %c0_19] : memref<1x128xbf16, #tpu.memory_space<vmem>>, vector<1x128xbf16>
    %26 = arith.truncf %24 : vector<8x128xf32> to vector<8x128xbf16>
    "tpu.trace_start"() <{level = 10 : i32, message = "oh,bh->ob"}> : () -> ()
    %cst_20 = arith.constant dense<0.000000e+00> : vector<1x8xf32>
    %27 = tpu.matmul %25, %26, %cst_20 {dimension_numbers = #tpu.dot_dimension_numbers<[1], [1], [0], [0], [0, 0, 1, 0], [], []>} : vector<1x128xbf16>, vector<8x128xbf16>, vector<1x8xf32> -> vector<1x8xf32>
    "tpu.trace_stop"() : () -> ()
    %c0_21 = arith.constant 0 : index
    %c0_22 = arith.constant 0 : index
    %28 = vector.load %arg9[%c0_21, %c0_22] : memref<1x1xf32, #tpu.memory_space<vmem>>, vector<1x1xf32>
    %29 = vector.broadcast %28 : vector<1x1xf32> to vector<1x8xf32>
    %30 = arith.addf %27, %29 : vector<1x8xf32>
    %c0_23 = arith.constant 0 : index
    %c0_24 = arith.constant 0 : index
    %31 = vector.load %arg10[%c0_23, %c0_24] : memref<1x8xf32, #tpu.memory_space<vmem>>, vector<1x8xf32>
    tpu.vector_store %arg10[%c0_23, %c0_24], %30 {strides = array<i32>} : memref<1x8xf32, #tpu.memory_space<vmem>>, vector<1x8xf32>,
    return
  }
  func.func @transform_0(%arg0: i32) -> (i32, i32) {
    %c0_i32 = arith.constant 0 : i32
    %c0_i32_0 = arith.constant 0 : i32
    return %arg0, %c0_i32 : i32, i32
  }
  func.func @transform_1(%arg0: i32) -> (i32, i32) {
    %c0_i32 = arith.constant 0 : i32
    %c0_i32_0 = arith.constant 0 : i32
    %c0_i32_1 = arith.constant 0 : i32
    return %c0_i32, %c0_i32_0 : i32, i32
  }
  func.func @transform_2(%arg0: i32) -> (i32, i32) {
    %c0_i32 = arith.constant 0 : i32
    %c0_i32_0 = arith.constant 0 : i32
    %c0_i32_1 = arith.constant 0 : i32
    return %c0_i32, %c0_i32_0 : i32, i32
  }
  func.func @transform_3(%arg0: i32) -> (i32, i32) {
    %c0_i32 = arith.constant 0 : i32
    %c0_i32_0 = arith.constant 0 : i32
    %c0_i32_1 = arith.constant 0 : i32
    return %c0_i32, %c0_i32_0 : i32, i32
  }
  func.func @transform_4(%arg0: i32) -> (i32, i32) {
    %c0_i32 = arith.constant 0 : i32
    %c0_i32_0 = arith.constant 0 : i32
    %c0_i32_1 = arith.constant 0 : i32
    return %c0_i32, %c0_i32_0 : i32, i32
  }
  func.func @transform_5(%arg0: i32) -> (i32, i32) {
    %c0_i32 = arith.constant 0 : i32
    %c0_i32_0 = arith.constant 0 : i32
    %c0_i32_1 = arith.constant 0 : i32
    return %c0_i32, %c0_i32_0 : i32, i32
  }
  func.func @transform_6(%arg0: i32) -> (i32, i32) {
    %c0_i32 = arith.constant 0 : i32
    %c0_i32_0 = arith.constant 0 : i32
    %c0_i32_1 = arith.constant 0 : i32
    return %c0_i32, %c0_i32_0 : i32, i32
  }
  func.func @transform_7(%arg0: i32) -> (i32, i32) {
    %c0_i32 = arith.constant 0 : i32
    %c0_i32_0 = arith.constant 0 : i32
    %c0_i32_1 = arith.constant 0 : i32
    return %c0_i32, %c0_i32_0 : i32, i32
  }
  func.func @transform_8(%arg0: i32) -> (i32, i32) {
    %c0_i32 = arith.constant 0 : i32
    %c0_i32_0 = arith.constant 0 : i32
    %c0_i32_1 = arith.constant 0 : i32
    return %c0_i32, %c0_i32_0 : i32, i32
  }
  func.func @transform_9(%arg0: i32) -> (i32, i32) {
    %c0_i32 = arith.constant 0 : i32
    %c0_i32_0 = arith.constant 0 : i32
    return %arg0, %c0_i32 : i32, i32
  }
}

</mosaic_0001>

<llo_original>
// kernel: tpu_custom_call.1
$region0: #{tpu_custom_call.1}
  #allocation0 [shape = 'u32[]', space=smem, size = 0x4, offset = 0x4, fixed_abs, tag = 'smem constant byte address 0x4 - core index']
  #allocation1 [shape = 'u32[144,128]{1,0:T(1,128)}', space=vmem, size = 0x12000, scoped, tag = 'internal scratch']
  #allocation2 [shape = 'f32[1,1]{1,0:T(1,128)S(1)}', space=vmem, size = 0x200, scoped, tag = 'scoped memory for tpu_custom_call.1']
  %s0 = inlined_call_operand.hbm [shape: f32[8,32], index: 0, kind: input, shape index: {}]
  %s1 = inlined_call_operand.hbm [shape: bf16[32,128], index: 1, kind: input, shape index: {}]
  %s2 = inlined_call_operand.vmem [shape: f32[1,128], index: 2, kind: input, shape index: {}]
  %s3 = inlined_call_operand.hbm [shape: bf16[128,128], index: 3, kind: input, shape index: {}]
  %s4 = inlined_call_operand.vmem [shape: f32[1,128], index: 4, kind: input, shape index: {}]
  %s5 = inlined_call_operand.hbm [shape: bf16[128,128], index: 5, kind: input, shape index: {}]
  %s6 = inlined_call_operand.vmem [shape: f32[1,128], index: 6, kind: input, shape index: {}]
  %s7 = inlined_call_operand.vmem [shape: bf16[1,128], index: 7, kind: input, shape index: {}]
  %s8 = inlined_call_operand.<no memory space> [shape: f32[1,1], index: 8, kind: input, shape index: {}]
  %s9 = inlined_call_operand.hbm [shape: f32[1,8], index: 9, kind: output, shape index: {}]
  %s10 = sld [smem:[#allocation0]]
  $region62: #{tpu_custom_call.1} parent=0
    _
  %s12 = ssub.s32 1, %s10
  %s13 = scalar_select 0, %s12, %s10
  %v14 = vstv %s8
  %15 = vst [vmem:[#allocation2] sm:$0x1] %v14
  $region1: #{tpu_custom_call.1} parent=0
    #allocation3 [shape = 'u8[4096]{0}', space=vmem, size = 0x1000, scoped, tag = 'input window, operand 0, single buffered']
    #allocation4 [shape = 's32[1]{0}', space=sflag, size = 0x4, scoped, tag = 'scoped memory for tpu_custom_call.1']
    #allocation5 [shape = 's32[1]{0}', space=sflag, size = 0x4, scoped, tag = 'scoped memory for tpu_custom_call.1']
    #allocation6 [shape = 'u8[8192]{0}', space=vmem, size = 0x2000, scoped, tag = 'input window, operand 1, single buffered']
    #allocation7 [shape = 's32[1]{0}', space=sflag, size = 0x4, scoped, tag = 'scoped memory for tpu_custom_call.1']
    #allocation8 [shape = 'u8[32768]{0}', space=vmem, size = 0x8000, scoped, tag = 'input window, operand 3, single buffered']
    #allocation9 [shape = 'u8[32768]{0}', space=vmem, size = 0x8000, scoped, tag = 'input window, operand 5, single buffered']
    #allocation10 [shape = 's32[1]{0}', space=sflag, size = 0x4, scoped, tag = 'scoped memory for tpu_custom_call.1']
    #allocation11 [shape = 'u8[512]{0}', space=vmem, size = 0x400, scoped, tag = 'output window, operand 0, single buffered']
    %16 = vsyncpa [#allocation4], 0
    %17 = vsyncpa [#allocation7], 0
    %18 = vsyncpa [#allocation10], 0
    %19 = vsyncpa [#allocation5], 0
    // Predicated region
    $region2: #{tpu_custom_call.1} parent=1 // pred_check
      _
    $region3: #{tpu_custom_call.1} parent=1 // pred_check_branch
      %21 = sbr.rel (0) target = $region5
    $region4: #{tpu_custom_call.1} parent=1 // pred_region
      %s23 = ssub.s32 128, 128
      %24 = vsyncadd [#allocation4], %s23
      %s26 = sshll.u32 [#allocation3], 4
      %s27 = int_to_ptr.vmem [resolvable:$true] %s26
      %29 = dma.hbm_to_vmem [thread:$0]  %s0, 128, %s27, [#allocation4]
    $region5: #{tpu_custom_call.1} parent=1 // pred_fallthru
      _
    // Predicated region
    $region6: #{tpu_custom_call.1} parent=1 // pred_check
      _
    $region7: #{tpu_custom_call.1} parent=1 // pred_check_branch
      %31 = sbr.rel (0) target = $region9
    $region8: #{tpu_custom_call.1} parent=1 // pred_region
      %s33 = ssub.s32 256, 256
      %34 = vsyncadd [#allocation7], %s33
      %s35 = sshll.u32 [#allocation6], 4
      %s36 = int_to_ptr.vmem [resolvable:$true] %s35
      %41 = dma.hbm_to_vmem [thread:$0]  %s1, 256, %s36, [#allocation7], 64, 64, 4
    $region9: #{tpu_custom_call.1} parent=1 // pred_fallthru
      _
    // Predicated region
    $region10: #{tpu_custom_call.1} parent=1 // pred_check
      _
    $region11: #{tpu_custom_call.1} parent=1 // pred_check_branch
      %43 = sbr.rel (0) target = $region13
    $region12: #{tpu_custom_call.1} parent=1 // pred_region
      _
    $region13: #{tpu_custom_call.1} parent=1 // pred_fallthru
      _
    // Predicated region
    $region14: #{tpu_custom_call.1} parent=1 // pred_check
      _
    $region15: #{tpu_custom_call.1} parent=1 // pred_check_branch
      %45 = sbr.rel (0) target = $region17
    $region16: #{tpu_custom_call.1} parent=1 // pred_region
      %s47 = ssub.s32 1024, 1024
      %48 = vsyncadd [#allocation7], %s47
      %s49 = sshll.u32 [#allocation8], 4
      %s50 = int_to_ptr.vmem [resolvable:$true] %s49
      %55 = dma.hbm_to_vmem [thread:$0]  %s3, 1024, %s50, [#allocation7], 64, 64, 4
    $region17: #{tpu_custom_call.1} parent=1 // pred_fallthru
      _
    // Predicated region
    $region18: #{tpu_custom_call.1} parent=1 // pred_check
      _
    $region19: #{tpu_custom_call.1} parent=1 // pred_check_branch
      %57 = sbr.rel (0) target = $region21
    $region20: #{tpu_custom_call.1} parent=1 // pred_region
      _
    $region21: #{tpu_custom_call.1} parent=1 // pred_fallthru
      _
    // Predicated region
    $region22: #{tpu_custom_call.1} parent=1 // pred_check
      _
    $region23: #{tpu_custom_call.1} parent=1 // pred_check_branch
      %59 = sbr.rel (0) target = $region25
    $region24: #{tpu_custom_call.1} parent=1 // pred_region
      %s61 = ssub.s32 1024, 1024
      %62 = vsyncadd [#allocation10], %s61
      %s63 = sshll.u32 [#allocation9], 4
      %s64 = int_to_ptr.vmem [resolvable:$true] %s63
      %69 = dma.hbm_to_vmem [thread:$0]  %s5, 1024, %s64, [#allocation10], 64, 64, 4
    $region25: #{tpu_custom_call.1} parent=1 // pred_fallthru
      _
    // Predicated region
    $region26: #{tpu_custom_call.1} parent=1 // pred_check
      _
    $region27: #{tpu_custom_call.1} parent=1 // pred_check_branch
      %71 = sbr.rel (0) target = $region29
    $region28: #{tpu_custom_call.1} parent=1 // pred_region
      _
    $region29: #{tpu_custom_call.1} parent=1 // pred_fallthru
      _
    // Predicated region
    $region30: #{tpu_custom_call.1} parent=1 // pred_check
      _
    $region31: #{tpu_custom_call.1} parent=1 // pred_check_branch
      %73 = sbr.rel (0) target = $region33
    $region32: #{tpu_custom_call.1} parent=1 // pred_region
      _
    $region33: #{tpu_custom_call.1} parent=1 // pred_fallthru
      _
    // Predicated region
    $region34: #{tpu_custom_call.1} parent=1 // pred_check
      _
    $region35: #{tpu_custom_call.1} parent=1 // pred_check_branch
      %75 = sbr.rel (0) target = $region37
    $region36: #{tpu_custom_call.1} parent=1 // pred_region
      _
    $region37: #{tpu_custom_call.1} parent=1 // pred_fallthru
      _
    // Predicated region
    $region38: #{tpu_custom_call.1} parent=1 // pred_check
      _
    $region39: #{tpu_custom_call.1} parent=1 // pred_check_branch
      %77 = sbr.rel (0) target = $region41
    $region40: #{tpu_custom_call.1} parent=1 // pred_region
      %78 = dma.done [#allocation4], 128
    $region41: #{tpu_custom_call.1} parent=1 // pred_fallthru
      _
    // Predicated region
    $region42: #{tpu_custom_call.1} parent=1 // pred_check
      _
    $region43: #{tpu_custom_call.1} parent=1 // pred_check_branch
      %80 = sbr.rel (0) target = $region45
    $region44: #{tpu_custom_call.1} parent=1 // pred_region
      %81 = dma.done [#allocation7], 256
    $region45: #{tpu_custom_call.1} parent=1 // pred_fallthru
      _
    // Predicated region
    $region46: #{tpu_custom_call.1} parent=1 // pred_check
      _
    $region47: #{tpu_custom_call.1} parent=1 // pred_check_branch
      %83 = sbr.rel (0) target = $region49
    $region48: #{tpu_custom_call.1} parent=1 // pred_region
      %84 = dma.done [#allocation7], 1024
    $region49: #{tpu_custom_call.1} parent=1 // pred_fallthru
      _
    // Predicated region
    $region50: #{tpu_custom_call.1} parent=1 // pred_check
      _
    $region51: #{tpu_custom_call.1} parent=1 // pred_check_branch
      %86 = sbr.rel (0) target = $region53
    $region52: #{tpu_custom_call.1} parent=1 // pred_region
      %87 = dma.done [#allocation10], 1024
    $region53: #{tpu_custom_call.1} parent=1 // pred_fallthru
      _
    %v89 = vld [vmem:[#allocation3] sm:$0xff]
    %v90 = vpack.c.bf16 %v89, %v89
    %v91 = vld [vmem:[#allocation6] sm:$0xf]
    %v92 = vld [vmem:[#allocation6 + $0x4] sm:$0xf]
    %v93 = vld [vmem:[#allocation6 + $0x8] sm:$0xf]
    %v94 = vld [vmem:[#allocation6 + $0xc] sm:$0xf]
    %v95 = vld [vmem:[%s2] sm:$0x1]
    %v97 = vlaneseq
    %v98 = vshrl.u32 %v97, 7
    %v99 = vsub.s32 0, %v98
    %v100 = vrot.slane %v95, %v99
    %v106 = vunpack.c.l.b16 %v91
    %v107 = vunpack.c.l.b16 %v92
    %v108 = vunpack.c.l.b16 %v93
    %v109 = vunpack.c.l.b16 %v94
    %v110 = vpack.c.b16 %v107, %v106
    %v111 = vpack.c.b16 %v109, %v108
    %vm114 = vcmask 261120
    %v116 = vsel %vm114, %v90, 0
    %118 = vmatprep.subr.bf16.mxu0 0
    %119 = vmatpush1.bf16.msra.mxu0 %v110
    %120 = vmatprep.subr.bf16.mxu0 0
    %121 = vmatpush1.bf16.msra.mxu0 %v111
    %122 = vmatprep.subr.bf16.mxu0 0
    %123 = vmatpush1.bf16.msra.mxu0 0
    %124 = vmatprep.subr.bf16.mxu0 0
    %125 = vmatpush1.bf16.msra.mxu0 0
    %126 = vmatprep.subr.bf16.mxu0 0
    %127 = vmatpush1.bf16.msra.mxu0 0
    %128 = vmatprep.subr.bf16.mxu0 0
    %129 = vmatpush1.bf16.msra.mxu0 0
    %130 = vmatprep.subr.bf16.mxu0 0
    %131 = vmatpush1.bf16.msra.mxu0 0
    %132 = vmatprep.subr.bf16.mxu0 0
    %133 = vmatpush1.bf16.msra.mxu0 0
    %134 = vmatprep.subr.bf16.mxu0 0
    %135 = vmatpush1.bf16.msra.mxu0 0
    %136 = vmatprep.subr.bf16.mxu0 0
    %137 = vmatpush1.bf16.msra.mxu0 0
    %138 = vmatprep.subr.bf16.mxu0 0
    %139 = vmatpush1.bf16.msra.mxu0 0
    %140 = vmatprep.subr.bf16.mxu0 0
    %141 = vmatpush1.bf16.msra.mxu0 0
    %142 = vmatprep.subr.bf16.mxu0 0
    %143 = vmatpush1.bf16.msra.mxu0 0
    %144 = vmatprep.subr.bf16.mxu0 0
    %145 = vmatpush1.bf16.msra.mxu0 0
    %146 = vmatprep.subr.bf16.mxu0 0
    %147 = vmatpush1.bf16.msra.mxu0 0
    %148 = vmatprep.subr.bf16.mxu0 0
    %149 = vmatpush1.bf16.msra.mxu0 0
    %150 = vmatprep.mubr.bf16.mxu0 0
    %151 = vmatmul.mubr.bf16.gmra.mrb[0].mxu0 %v116
    %v152 = vpop.f32.mrb[0].mxu0
    %v153 = vadd.f32 %v100, %v152
    %v154 = vpop.f32.mrb[0].mxu0
    %v155 = vpop.f32.mrb[0].mxu0
    %v156 = vpop.f32.mrb[0].mxu0
    %157 = vdwg.mxu0
    %v158 = vmax.f32 %v153, 0.0
    %v159 = vpack.c.bf16 %v158, %v158
    %v160 = vld [vmem:[#allocation8] sm:$0xf]
    %v161 = vld [vmem:[#allocation8 + $0x4] sm:$0xf]
    %v162 = vld [vmem:[#allocation8 + $0x8] sm:$0xf]
    %v163 = vld [vmem:[#allocation8 + $0xc] sm:$0xf]
    %v164 = vld [vmem:[#allocation8 + $0x10] sm:$0xf]
    %v165 = vld [vmem:[#allocation8 + $0x14] sm:$0xf]
    %v166 = vld [vmem:[#allocation8 + $0x18] sm:$0xf]
    %v167 = vld [vmem:[#allocation8 + $0x1c] sm:$0xf]
    %v168 = vld [vmem:[#allocation8 + $0x20] sm:$0xf]
    %v169 = vld [vmem:[#allocation8 + $0x24] sm:$0xf]
    %v170 = vld [vmem:[#allocation8 + $0x28] sm:$0xf]
    %v171 = vld [vmem:[#allocation8 + $0x2c] sm:$0xf]
    %v172 = vld [vmem:[#allocation8 + $0x30] sm:$0xf]
    %v173 = vld [vmem:[#allocation8 + $0x34] sm:$0xf]
    %v174 = vld [vmem:[#allocation8 + $0x38] sm:$0xf]
    %v175 = vld [vmem:[#allocation8 + $0x3c] sm:$0xf]
    %v176 = vld [vmem:[%s4] sm:$0x1]
    %v178 = vlaneseq
    %v179 = vshrl.u32 %v178, 7
    %v180 = vsub.s32 0, %v179
    %v181 = vrot.slane %v176, %v180
    %v199 = vunpack.c.l.b16 %v160
    %v200 = vunpack.c.l.b16 %v161
    %v201 = vunpack.c.l.b16 %v162
    %v202 = vunpack.c.l.b16 %v163
    %v203 = vunpack.c.l.b16 %v164
    %v204 = vunpack.c.l.b16 %v165
    %v205 = vunpack.c.l.b16 %v166
    %v206 = vunpack.c.l.b16 %v167
    %v207 = vunpack.c.l.b16 %v168
    %v208 = vunpack.c.l.b16 %v169
    %v209 = vunpack.c.l.b16 %v170
    %v210 = vunpack.c.l.b16 %v171
    %v211 = vunpack.c.l.b16 %v172
    %v212 = vunpack.c.l.b16 %v173
    %v213 = vunpack.c.l.b16 %v174
    %v214 = vunpack.c.l.b16 %v175
    %v215 = vpack.c.b16 %v200, %v199
    %v216 = vpack.c.b16 %v202, %v201
    %v217 = vpack.c.b16 %v204, %v203
    %v218 = vpack.c.b16 %v206, %v205
    %v219 = vpack.c.b16 %v208, %v207
    %v220 = vpack.c.b16 %v210, %v209
    %v221 = vpack.c.b16 %v212, %v211
    %v222 = vpack.c.b16 %v214, %v213
    %231 = vmatprep.subr.bf16.mxu0 0
    %232 = vmatpush1.bf16.msra.mxu0 %v215
    %233 = vmatprep.subr.bf16.mxu0 0
    %234 = vmatpush1.bf16.msra.mxu0 %v216
    %235 = vmatprep.subr.bf16.mxu0 0
    %236 = vmatpush1.bf16.msra.mxu0 %v217
    %237 = vmatprep.subr.bf16.mxu0 0
    %238 = vmatpush1.bf16.msra.mxu0 %v218
    %239 = vmatprep.subr.bf16.mxu0 0
    %240 = vmatpush1.bf16.msra.mxu0 %v219
    %241 = vmatprep.subr.bf16.mxu0 0
    %242 = vmatpush1.bf16.msra.mxu0 %v220
    %243 = vmatprep.subr.bf16.mxu0 0
    %244 = vmatpush1.bf16.msra.mxu0 %v221
    %245 = vmatprep.subr.bf16.mxu0 0
    %246 = vmatpush1.bf16.msra.mxu0 %v222
    %247 = vmatprep.subr.bf16.mxu0 0
    %248 = vmatpush1.bf16.msra.mxu0 0
    %249 = vmatprep.subr.bf16.mxu0 0
    %250 = vmatpush1.bf16.msra.mxu0 0
    %251 = vmatprep.subr.bf16.mxu0 0
    %252 = vmatpush1.bf16.msra.mxu0 0
    %253 = vmatprep.subr.bf16.mxu0 0
    %254 = vmatpush1.bf16.msra.mxu0 0
    %255 = vmatprep.subr.bf16.mxu0 0
    %256 = vmatpush1.bf16.msra.mxu0 0
    %257 = vmatprep.subr.bf16.mxu0 0
    %258 = vmatpush1.bf16.msra.mxu0 0
    %259 = vmatprep.subr.bf16.mxu0 0
    %260 = vmatpush1.bf16.msra.mxu0 0
    %261 = vmatprep.subr.bf16.mxu0 0
    %262 = vmatpush1.bf16.msra.mxu0 0
    %263 = vmatprep.mubr.bf16.mxu0 0
    %264 = vmatmul.mubr.bf16.gmra.mrb[0].mxu0 %v159
    %v265 = vpop.f32.mrb[0].mxu0
    %v266 = vadd.f32 %v181, %v265
    %v267 = vpop.f32.mrb[0].mxu0
    %v268 = vpop.f32.mrb[0].mxu0
    %v269 = vpop.f32.mrb[0].mxu0
    %270 = vdwg.mxu0
    %v271 = vmax.f32 %v266, 0.0
    %v272 = vpack.c.bf16 %v271, %v271
    %v273 = vld [vmem:[#allocation9] sm:$0xf]
    %v274 = vld [vmem:[#allocation9 + $0x4] sm:$0xf]
    %v275 = vld [vmem:[#allocation9 + $0x8] sm:$0xf]
    %v276 = vld [vmem:[#allocation9 + $0xc] sm:$0xf]
    %v277 = vld [vmem:[#allocation9 + $0x10] sm:$0xf]
    %v278 = vld [vmem:[#allocation9 + $0x14] sm:$0xf]
    %v279 = vld [vmem:[#allocation9 + $0x18] sm:$0xf]
    %v280 = vld [vmem:[#allocation9 + $0x1c] sm:$0xf]
    %v281 = vld [vmem:[#allocation9 + $0x20] sm:$0xf]
    %v282 = vld [vmem:[#allocation9 + $0x24] sm:$0xf]
    %v283 = vld [vmem:[#allocation9 + $0x28] sm:$0xf]
    %v284 = vld [vmem:[#allocation9 + $0x2c] sm:$0xf]
    %v285 = vld [vmem:[#allocation9 + $0x30] sm:$0xf]
    %v286 = vld [vmem:[#allocation9 + $0x34] sm:$0xf]
    %v287 = vld [vmem:[#allocation9 + $0x38] sm:$0xf]
    %v288 = vld [vmem:[#allocation9 + $0x3c] sm:$0xf]
    %v289 = vld [vmem:[%s6] sm:$0x1]
    %v291 = vlaneseq
    %v292 = vshrl.u32 %v291, 7
    %v293 = vsub.s32 0, %v292
    %v294 = vrot.slane %v289, %v293
    %v312 = vunpack.c.l.b16 %v273
    %v313 = vunpack.c.l.b16 %v274
    %v314 = vunpack.c.l.b16 %v275
    %v315 = vunpack.c.l.b16 %v276
    %v316 = vunpack.c.l.b16 %v277
    %v317 = vunpack.c.l.b16 %v278
    %v318 = vunpack.c.l.b16 %v279
    %v319 = vunpack.c.l.b16 %v280
    %v320 = vunpack.c.l.b16 %v281
    %v321 = vunpack.c.l.b16 %v282
    %v322 = vunpack.c.l.b16 %v283
    %v323 = vunpack.c.l.b16 %v284
    %v324 = vunpack.c.l.b16 %v285
    %v325 = vunpack.c.l.b16 %v286
    %v326 = vunpack.c.l.b16 %v287
    %v327 = vunpack.c.l.b16 %v288
    %v328 = vpack.c.b16 %v313, %v312
    %v329 = vpack.c.b16 %v315, %v314
    %v330 = vpack.c.b16 %v317, %v316
    %v331 = vpack.c.b16 %v319, %v318
    %v332 = vpack.c.b16 %v321, %v320
    %v333 = vpack.c.b16 %v323, %v322
    %v334 = vpack.c.b16 %v325, %v324
    %v335 = vpack.c.b16 %v327, %v326
    %344 = vmatprep.subr.bf16.mxu0 0
    %345 = vmatpush1.bf16.msra.mxu0 %v328
    %346 = vmatprep.subr.bf16.mxu0 0
    %347 = vmatpush1.bf16.msra.mxu0 %v329
    %348 = vmatprep.subr.bf16.mxu0 0
    %349 = vmatpush1.bf16.msra.mxu0 %v330
    %350 = vmatprep.subr.bf16.mxu0 0
    %351 = vmatpush1.bf16.msra.mxu0 %v331
    %352 = vmatprep.subr.bf16.mxu0 0
    %353 = vmatpush1.bf16.msra.mxu0 %v332
    %354 = vmatprep.subr.bf16.mxu0 0
    %355 = vmatpush1.bf16.msra.mxu0 %v333
    %356 = vmatprep.subr.bf16.mxu0 0
    %357 = vmatpush1.bf16.msra.mxu0 %v334
    %358 = vmatprep.subr.bf16.mxu0 0
    %359 = vmatpush1.bf16.msra.mxu0 %v335
    %360 = vmatprep.subr.bf16.mxu0 0
    %361 = vmatpush1.bf16.msra.mxu0 0
    %362 = vmatprep.subr.bf16.mxu0 0
    %363 = vmatpush1.bf16.msra.mxu0 0
    %364 = vmatprep.subr.bf16.mxu0 0
    %365 = vmatpush1.bf16.msra.mxu0 0
    %366 = vmatprep.subr.bf16.mxu0 0
    %367 = vmatpush1.bf16.msra.mxu0 0
    %368 = vmatprep.subr.bf16.mxu0 0
    %369 = vmatpush1.bf16.msra.mxu0 0
    %370 = vmatprep.subr.bf16.mxu0 0
    %371 = vmatpush1.bf16.msra.mxu0 0
    %372 = vmatprep.subr.bf16.mxu0 0
    %373 = vmatpush1.bf16.msra.mxu0 0
    %374 = vmatprep.subr.bf16.mxu0 0
    %375 = vmatpush1.bf16.msra.mxu0 0
    %376 = vmatprep.mubr.bf16.mxu0 0
    %377 = vmatmul.mubr.bf16.gmra.mrb[0].mxu0 %v272
    %v378 = vpop.f32.mrb[0].mxu0
    %v379 = vadd.f32 %v294, %v378
    %v380 = vpop.f32.mrb[0].mxu0
    %v381 = vpop.f32.mrb[0].mxu0
    %v382 = vpop.f32.mrb[0].mxu0
    %383 = vdwg.mxu0
    %v384 = vmax.f32 %v379, 0.0
    %v385 = vld [vmem:[%s7] sm:$0x1]
    %v386 = vpack.c.bf16 %v384, %v384
    %v387 = vld [vmem:[#allocation2] sm:$0x1]
    %389 = vset.pattern.permute.xlu0 0
    %390 = vperm.xlu0 %389, %v387
    %v391 = vpop.permute.xlu0 %390
    %v393 = vlaneseq
    %v394 = vshrl.u32 %v393, 7
    %v395 = vsub.s32 0, %v394
    %v396 = vrot.slane %v391, %v395
    %397 = vmatprep.subr.bf16.mxu0 0
    %398 = vmatpush1.bf16.xpose.msra.mxu0 %v386
    %399 = vmatprep.subr.bf16.mxu0 0
    %400 = vmatpush1.bf16.xpose.msra.mxu0 0
    %401 = vmatprep.subr.bf16.mxu0 0
    %402 = vmatpush1.bf16.xpose.msra.mxu0 0
    %403 = vmatprep.subr.bf16.mxu0 0
    %404 = vmatpush1.bf16.xpose.msra.mxu0 0
    %405 = vmatprep.subr.bf16.mxu0 0
    %406 = vmatpush1.bf16.xpose.msra.mxu0 0
    %407 = vmatprep.subr.bf16.mxu0 0
    %408 = vmatpush1.bf16.xpose.msra.mxu0 0
    %409 = vmatprep.subr.bf16.mxu0 0
    %410 = vmatpush1.bf16.xpose.msra.mxu0 0
    %411 = vmatprep.subr.bf16.mxu0 0
    %412 = vmatpush1.bf16.xpose.msra.mxu0 0
    %413 = vmatprep.subr.bf16.mxu0 0
    %414 = vmatpush1.bf16.xpose.msra.mxu0 0
    %415 = vmatprep.subr.bf16.mxu0 0
    %416 = vmatpush1.bf16.xpose.msra.mxu0 0
    %417 = vmatprep.subr.bf16.mxu0 0
    %418 = vmatpush1.bf16.xpose.msra.mxu0 0
    %419 = vmatprep.subr.bf16.mxu0 0
    %420 = vmatpush1.bf16.xpose.msra.mxu0 0
    %421 = vmatprep.subr.bf16.mxu0 0
    %422 = vmatpush1.bf16.xpose.msra.mxu0 0
    %423 = vmatprep.subr.bf16.mxu0 0
    %424 = vmatpush1.bf16.xpose.msra.mxu0 0
    %425 = vmatprep.subr.bf16.mxu0 0
    %426 = vmatpush1.bf16.xpose.msra.mxu0 0
    %427 = vmatprep.subr.bf16.mxu0 0
    %428 = vmatpush1.bf16.xpose.msra.mxu0 0
    %429 = vmatprep.mubr.bf16.mxu0 0
    %430 = vmatmul.mubr.bf16.gmra.mrb[0].mxu0 %v385
    %v431 = vpop.f32.mrb[0].mxu0
    %v432 = vadd.f32 %v396, %v431
    %v433 = vpop.f32.mrb[0].mxu0
    %v434 = vpop.f32.mrb[0].mxu0
    %v435 = vpop.f32.mrb[0].mxu0
    %436 = vdwg.mxu0
    %vm437 = vcmask 57344
    %438 = vst.msk [vmem:[#allocation11] sm:$0x1] %vm437, %v432
    // Predicated region
    $region54: #{tpu_custom_call.1} parent=1 // pred_check
      _
    $region55: #{tpu_custom_call.1} parent=1 // pred_check_branch
      %440 = sbr.rel (0) target = $region57
    $region56: #{tpu_custom_call.1} parent=1 // pred_region
      %s442 = ssub.s32 16, 16
      %443 = vsyncadd [#allocation5], %s442
      %s445 = sshll.u32 [#allocation11], 4
      %s446 = int_to_ptr.vmem [resolvable:$true] %s445
      %448 = dma.vmem_to_hbm [thread:$0]  %s446, 16, %s9, [#allocation5]
    $region57: #{tpu_custom_call.1} parent=1 // pred_fallthru
      _
    // Predicated region
    $region58: #{tpu_custom_call.1} parent=1 // pred_check
      _
    $region59: #{tpu_custom_call.1} parent=1 // pred_check_branch
      %450 = sbr.rel (0) target = $region61
    $region60: #{tpu_custom_call.1} parent=1 // pred_region
      %451 = dma.done [#allocation5], 16
    $region61: #{tpu_custom_call.1} parent=1 // pred_fallthru
      _
    %452 = vsyncpa [#allocation4], 1
    %453 = vsyncpa [#allocation7], 1
    %454 = vsyncpa [#allocation10], 1
    %455 = vsyncpa [#allocation5], 1

</llo_original>
